<compile_context>
chip_gen: v7x
topology: tpu7x:2x2x1
jax: 0.10.0
libtpu: 0.0.40
codegen_flags: <defaults>
</compile_context>

<pallas_src>
import functools

import jax
import jax.numpy as jnp
from jax.experimental import pallas as pl
from jax.experimental.pallas import tpu as pltpu


def _round_up(n: int, m: int) -> int:
    return ((n + m - 1) // m) * m


def _mlp_kernel(x_ref,
                w1_ref, b1_ref,
                w2_ref, b2_ref,
                w3_ref, b3_ref,
                w4_ref, b4_ref,
                o_ref):
    """Fused 4-layer MLP on one batch tile: (Linear + ReLU) x 3 + Linear.

    x arrives as f32 and is cast to bf16 in-kernel (VPU cast hides under the
    MXU). Weights are bf16 [in, out]; every dot accumulates in f32 on the
    MXU, bias add + ReLU run on the VPU in f32, activations re-cast to bf16
    between layers so all four matmuls take the bf16 MXU path.
    """
    x = x_ref[...].astype(jnp.bfloat16)

    h = jnp.dot(x, w1_ref[...],
                preferred_element_type=jnp.float32) + b1_ref[...]
    h = jnp.maximum(h, 0.0).astype(jnp.bfloat16)

    h = jnp.dot(h, w2_ref[...],
                preferred_element_type=jnp.float32) + b2_ref[...]
    h = jnp.maximum(h, 0.0).astype(jnp.bfloat16)

    h = jnp.dot(h, w3_ref[...],
                preferred_element_type=jnp.float32) + b3_ref[...]
    h = jnp.maximum(h, 0.0).astype(jnp.bfloat16)

    h = jnp.dot(h, w4_ref[...],
                preferred_element_type=jnp.float32) + b4_ref[...]

    o_ref[...] = h.astype(o_ref.dtype)


def prepare_params(params, compute_dtype=jnp.bfloat16):
    """One-time parameter prep — do NOT run per forward call.

    - transposes PyTorch-convention [out, in] weights to [in, out],
    - casts weights to bf16 (halves the dominant weight HBM traffic),
    - keeps biases in f32 as [1, out] rows (added to the f32 accumulator),
    - zero-pads layer 3's 64-wide output to 128 (w3 columns, b3) and w4's
      input rows to 128, so h3 is lane-dense and dot-4's K dim fills the MXU
      (ReLU of the zero pads is 0 and the zero rows of w4 contribute nothing),
    - zero-pads the final layer's output dim up to a lane-dense multiple of
      128 so the kernel writes unmasked, full-lane stores.

    Returns (prepped_dict, num_classes).
    """
    num_classes = params["w4"].shape[0]
    nc_pad = _round_up(max(num_classes, 128), 128)

    h3 = params["w3"].shape[0]            # 64
    h3_pad = _round_up(max(h3, 128), 128)  # 128

    w3_t = jnp.asarray(params["w3"]).T      # (256, 64)
    w4_t = jnp.asarray(params["w4"]).T      # (64, nc)

    prepped = {
        "w1": jnp.asarray(params["w1"]).T.astype(compute_dtype),
        "w2": jnp.asarray(params["w2"]).T.astype(compute_dtype),
        "w3": jnp.pad(w3_t, ((0, 0), (0, h3_pad - h3))).astype(compute_dtype),
        "w4": jnp.pad(w4_t, ((0, h3_pad - h3),
                             (0, nc_pad - num_classes))).astype(compute_dtype),
        "b1": jnp.asarray(params["b1"], jnp.float32)[None, :],
        "b2": jnp.asarray(params["b2"], jnp.float32)[None, :],
        "b3": jnp.pad(jnp.asarray(params["b3"], jnp.float32),
                      (0, h3_pad - h3))[None, :],
        "b4": jnp.pad(jnp.asarray(params["b4"], jnp.float32),
                      (0, nc_pad - num_classes))[None, :],
    }
    return prepped, num_classes


@functools.partial(jax.jit, static_argnames=("num_classes",))
def mlp_post_crnn_pretrained(x, prepped, *, num_classes):
    """x: [B, F] f32; prepped: output of prepare_params; returns [B, num_classes] f32."""
    B, F = x.shape
    nc_pad = prepped["w4"].shape[1]

    # Batch tile: large (up to 2048) to amortize the ~0.35 us per-grid-step
    # overhead, a multiple of 16 (bf16 sublane packing), and ~B/2 for moderate
    # batches so the grid has >=2 steps and both v7x TensorCores get work.
    BM = min(2048, max(16, _round_up(pl.cdiv(B, 2), 16)))
    grid = (pl.cdiv(B, BM),)   # ragged last tile handled by Pallas (no jnp.pad pass)

    # Weights / biases: full-array blocks, constant block index -> loaded once,
    # VMEM-resident across all batch-tile iterations.
    const = lambda shape: pl.BlockSpec(shape, lambda i: (0,) * len(shape))

    d1 = prepped["w1"].shape[1]
    d2 = prepped["w2"].shape[1]
    d3 = prepped["w3"].shape[1]
    flops = 2 * B * (F * d1 + d1 * d2 + d2 * d3 + d3 * nc_pad)
    bytes_accessed = (
        x.size * x.dtype.itemsize
        + sum(v.size * v.dtype.itemsize for v in prepped.values())
        + B * nc_pad * 2)

    out = pl.pallas_call(
        _mlp_kernel,
        grid=grid,
        in_specs=[
            pl.BlockSpec((BM, F), lambda i: (i, 0)),
            const(prepped["w1"].shape), const(prepped["b1"].shape),
            const(prepped["w2"].shape), const(prepped["b2"].shape),
            const(prepped["w3"].shape), const(prepped["b3"].shape),
            const(prepped["w4"].shape), const(prepped["b4"].shape),
        ],
        out_specs=pl.BlockSpec((BM, nc_pad), lambda i: (i, 0)),
        # bf16, lane-dense (128-wide) output: dense vst, half the HBM stream.
        out_shape=jax.ShapeDtypeStruct((B, nc_pad), jnp.bfloat16),
        compiler_params=pltpu.CompilerParams(
            dimension_semantics=("parallel",),
            vmem_limit_bytes=64 * 1024 * 1024),
        cost_estimate=pl.CostEstimate(
            flops=flops, transcendentals=0, bytes_accessed=bytes_accessed),
    )(x,
      prepped["w1"], prepped["b1"],
      prepped["w2"], prepped["b2"],
      prepped["w3"], prepped["b3"],
      prepped["w4"], prepped["b4"])

    # Strip the lane padding of the final layer; tiny slice/cast outside.
    return out[:, :num_classes].astype(jnp.float32)


def init_params(key, in_features, num_classes):
    """Deterministic synthetic init, PyTorch nn.Linear shape convention."""
    dims = [(512, in_features), (256, 512), (64, 256), (num_classes, 64)]
    params = {}
    keys = jax.random.split(key, 2 * len(dims))
    for i, (out_f, in_f) in enumerate(dims):
        bound = 1.0 / (in_f ** 0.5)
        params[f"w{i+1}"] = jax.random.uniform(
            keys[2 * i], (out_f, in_f), jnp.float32, -bound, bound)
        params[f"b{i+1}"] = jax.random.uniform(
            keys[2 * i + 1], (out_f,), jnp.float32, -bound, bound)
    return params


def reference_forward(x, params):
    """Pure-JAX f32 reference (mirrors torch.nn.Sequential exactly)."""
    h = jnp.maximum(x @ params["w1"].T + params["b1"], 0.0)
    h = jnp.maximum(h @ params["w2"].T + params["b2"], 0.0)
    h = jnp.maximum(h @ params["w3"].T + params["b3"], 0.0)
    return h @ params["w4"].T + params["b4"]


if __name__ == "__main__":
    # input_size = (8, 16) -> in_features = 128; approach = ESC10 -> 10 classes.
    input_size = (8, 16)
    in_features = input_size[0] * input_size[1]
    num_classes = 10
    batch = 2

    key = jax.random.PRNGKey(0)
    k_x, k_p = jax.random.split(key)
    x = jax.random.normal(k_x, (batch, in_features), jnp.float32)
    params = init_params(k_p, in_features, num_classes)

    # One-time weight prep (transpose / bf16 cast / lane padding) outside jit.
    prepped, nc = prepare_params(params)

    out = mlp_post_crnn_pretrained(x, prepped, num_classes=nc)
    out = jax.block_until_ready(out)

    ref = reference_forward(x, params)
    assert out.shape == (batch, num_classes)
    # bf16 operands + bf16 output store (f32 accumulation) -> loosened tolerance.
    max_err = float(jnp.max(jnp.abs(out - ref)))
    assert jnp.allclose(out, ref, atol=5e-2, rtol=5e-2), \
        f"mismatch vs reference (max abs err {max_err})"

    print("KERNEL_OK")
</pallas_src>

<mosaic_0001>
module attributes {stable_mosaic.version = 11 : i64} {
  func.func @_mlp_kernel(%arg0: i32, %arg1: memref<16x128xf32, #tpu.memory_space<vmem>>, %arg2: memref<128x512xbf16, #tpu.memory_space<vmem>>, %arg3: memref<1x512xf32, #tpu.memory_space<vmem>>, %arg4: memref<512x256xbf16, #tpu.memory_space<vmem>>, %arg5: memref<1x256xf32, #tpu.memory_space<vmem>>, %arg6: memref<256x128xbf16, #tpu.memory_space<vmem>>, %arg7: memref<1x128xf32, #tpu.memory_space<vmem>>, %arg8: memref<128x128xbf16, #tpu.memory_space<vmem>>, %arg9: memref<1x128xf32, #tpu.memory_space<vmem>>, %arg10: memref<16x128xbf16, #tpu.memory_space<vmem>>) attributes {dimension_semantics = [#tpu.dimension_semantics<parallel>], iteration_bounds = array<i64: 1>, scalar_prefetch = 0 : i64, scratch_operands = 0 : i64, tpu.core_type = #tpu.core_type<tc>, window_params = [{transform_indices = @transform_0, window_bounds = array<i64: 16, 128>}, {pipeline_mode = #tpu.pipeline_mode<synchronous>, transform_indices = @transform_1, window_bounds = array<i64: 128, 512>}, {pipeline_mode = #tpu.pipeline_mode<synchronous>, transform_indices = @transform_2, window_bounds = array<i64: 1, 512>}, {pipeline_mode = #tpu.pipeline_mode<synchronous>, transform_indices = @transform_3, window_bounds = array<i64: 512, 256>}, {pipeline_mode = #tpu.pipeline_mode<synchronous>, transform_indices = @transform_4, window_bounds = array<i64: 1, 256>}, {pipeline_mode = #tpu.pipeline_mode<synchronous>, transform_indices = @transform_5, window_bounds = array<i64: 256, 128>}, {pipeline_mode = #tpu.pipeline_mode<synchronous>, transform_indices = @transform_6, window_bounds = array<i64: 1, 128>}, {pipeline_mode = #tpu.pipeline_mode<synchronous>, transform_indices = @transform_7, window_bounds = array<i64: 128, 128>}, {pipeline_mode = #tpu.pipeline_mode<synchronous>, transform_indices = @transform_8, window_bounds = array<i64: 1, 128>}, {transform_indices = @transform_9, window_bounds = array<i64: 16, 128>}]} {
    %c0 = arith.constant 0 : index
    %c0_0 = arith.constant 0 : index
    %0 = vector.load %arg1[%c0, %c0_0] : memref<16x128xf32, #tpu.memory_space<vmem>>, vector<16x128xf32>
    %1 = arith.truncf %0 : vector<16x128xf32> to vector<16x128xbf16>
    %c0_1 = arith.constant 0 : index
    %c0_2 = arith.constant 0 : index
    %2 = vector.load %arg2[%c0_1, %c0_2] : memref<128x512xbf16, #tpu.memory_space<vmem>>, vector<128x512xbf16>
    %cst = arith.constant dense<0.000000e+00> : vector<16x512xf32>
    %3 = tpu.matmul %1, %2, %cst {dimension_numbers = #tpu.dot_dimension_numbers<[1], [0], [0], [1], [0, 0, 1, 1], [], []>} : vector<16x128xbf16>, vector<128x512xbf16>, vector<16x512xf32> -> vector<16x512xf32>
    %c0_3 = arith.constant 0 : index
    %c0_4 = arith.constant 0 : index
    %4 = vector.load %arg3[%c0_3, %c0_4] : memref<1x512xf32, #tpu.memory_space<vmem>>, vector<1x512xf32>
    %5 = vector.broadcast %4 : vector<1x512xf32> to vector<16x512xf32>
    %6 = arith.addf %3, %5 : vector<16x512xf32>
    %cst_5 = arith.constant 0.000000e+00 : f32
    %7 = vector.broadcast %cst_5 : f32 to vector<16x512xf32>
    %8 = arith.maximumf %6, %7 : vector<16x512xf32>
    %9 = arith.truncf %8 : vector<16x512xf32> to vector<16x512xbf16>
    %c0_6 = arith.constant 0 : index
    %c0_7 = arith.constant 0 : index
    %10 = vector.load %arg4[%c0_6, %c0_7] : memref<512x256xbf16, #tpu.memory_space<vmem>>, vector<512x256xbf16>
    %cst_8 = arith.constant dense<0.000000e+00> : vector<16x256xf32>
    %11 = tpu.matmul %9, %10, %cst_8 {dimension_numbers = #tpu.dot_dimension_numbers<[1], [0], [0], [1], [0, 0, 1, 1], [], []>} : vector<16x512xbf16>, vector<512x256xbf16>, vector<16x256xf32> -> vector<16x256xf32>
    %c0_9 = arith.constant 0 : index
    %c0_10 = arith.constant 0 : index
    %12 = vector.load %arg5[%c0_9, %c0_10] : memref<1x256xf32, #tpu.memory_space<vmem>>, vector<1x256xf32>
    %13 = vector.broadcast %12 : vector<1x256xf32> to vector<16x256xf32>
    %14 = arith.addf %11, %13 : vector<16x256xf32>
    %cst_11 = arith.constant 0.000000e+00 : f32
    %15 = vector.broadcast %cst_11 : f32 to vector<16x256xf32>
    %16 = arith.maximumf %14, %15 : vector<16x256xf32>
    %17 = arith.truncf %16 : vector<16x256xf32> to vector<16x256xbf16>
    %c0_12 = arith.constant 0 : index
    %c0_13 = arith.constant 0 : index
    %18 = vector.load %arg6[%c0_12, %c0_13] : memref<256x128xbf16, #tpu.memory_space<vmem>>, vector<256x128xbf16>
    %cst_14 = arith.constant dense<0.000000e+00> : vector<16x128xf32>
    %19 = tpu.matmul %17, %18, %cst_14 {dimension_numbers = #tpu.dot_dimension_numbers<[1], [0], [0], [1], [0, 0, 1, 1], [], []>} : vector<16x256xbf16>, vector<256x128xbf16>, vector<16x128xf32> -> vector<16x128xf32>
    %c0_15 = arith.constant 0 : index
    %c0_16 = arith.constant 0 : index
    %20 = vector.load %arg7[%c0_15, %c0_16] : memref<1x128xf32, #tpu.memory_space<vmem>>, vector<1x128xf32>
    %21 = vector.broadcast %20 : vector<1x128xf32> to vector<16x128xf32>
    %22 = arith.addf %19, %21 : vector<16x128xf32>
    %cst_17 = arith.constant 0.000000e+00 : f32
    %23 = vector.broadcast %cst_17 : f32 to vector<16x128xf32>
    %24 = arith.maximumf %22, %23 : vector<16x128xf32>
    %25 = arith.truncf %24 : vector<16x128xf32> to vector<16x128xbf16>
    %c0_18 = arith.constant 0 : index
    %c0_19 = arith.constant 0 : index
    %26 = vector.load %arg8[%c0_18, %c0_19] : memref<128x128xbf16, #tpu.memory_space<vmem>>, vector<128x128xbf16>
    %cst_20 = arith.constant dense<0.000000e+00> : vector<16x128xf32>
    %27 = tpu.matmul %25, %26, %cst_20 {dimension_numbers = #tpu.dot_dimension_numbers<[1], [0], [0], [1], [0, 0, 1, 1], [], []>} : vector<16x128xbf16>, vector<128x128xbf16>, vector<16x128xf32> -> vector<16x128xf32>
    %c0_21 = arith.constant 0 : index
    %c0_22 = arith.constant 0 : index
    %28 = vector.load %arg9[%c0_21, %c0_22] : memref<1x128xf32, #tpu.memory_space<vmem>>, vector<1x128xf32>
    %29 = vector.broadcast %28 : vector<1x128xf32> to vector<16x128xf32>
    %30 = arith.addf %27, %29 : vector<16x128xf32>
    %31 = arith.truncf %30 : vector<16x128xf32> to vector<16x128xbf16>
    %c0_23 = arith.constant 0 : index
    %c0_24 = arith.constant 0 : index
    %32 = vector.load %arg10[%c0_23, %c0_24] : memref<16x128xbf16, #tpu.memory_space<vmem>>, vector<16x128xbf16>
    tpu.vector_store %arg10[%c0_23, %c0_24], %31 {strides = array<i32>} : memref<16x128xbf16, #tpu.memory_space<vmem>>, vector<16x128xbf16>,
    return
  }
  func.func @transform_0(%arg0: i32) -> (i32, i32) {
    %c0_i32 = arith.constant 0 : i32
    %c0_i32_0 = arith.constant 0 : i32
    return %arg0, %c0_i32 : i32, i32
  }
  func.func @transform_1(%arg0: i32) -> (i32, i32) {
    %c0_i32 = arith.constant 0 : i32
    %c0_i32_0 = arith.constant 0 : i32
    %c0_i32_1 = arith.constant 0 : i32
    return %c0_i32, %c0_i32_0 : i32, i32
  }
  func.func @transform_2(%arg0: i32) -> (i32, i32) {
    %c0_i32 = arith.constant 0 : i32
    %c0_i32_0 = arith.constant 0 : i32
    %c0_i32_1 = arith.constant 0 : i32
    return %c0_i32, %c0_i32_0 : i32, i32
  }
  func.func @transform_3(%arg0: i32) -> (i32, i32) {
    %c0_i32 = arith.constant 0 : i32
    %c0_i32_0 = arith.constant 0 : i32
    %c0_i32_1 = arith.constant 0 : i32
    return %c0_i32, %c0_i32_0 : i32, i32
  }
  func.func @transform_4(%arg0: i32) -> (i32, i32) {
    %c0_i32 = arith.constant 0 : i32
    %c0_i32_0 = arith.constant 0 : i32
    %c0_i32_1 = arith.constant 0 : i32
    return %c0_i32, %c0_i32_0 : i32, i32
  }
  func.func @transform_5(%arg0: i32) -> (i32, i32) {
    %c0_i32 = arith.constant 0 : i32
    %c0_i32_0 = arith.constant 0 : i32
    %c0_i32_1 = arith.constant 0 : i32
    return %c0_i32, %c0_i32_0 : i32, i32
  }
  func.func @transform_6(%arg0: i32) -> (i32, i32) {
    %c0_i32 = arith.constant 0 : i32
    %c0_i32_0 = arith.constant 0 : i32
    %c0_i32_1 = arith.constant 0 : i32
    return %c0_i32, %c0_i32_0 : i32, i32
  }
  func.func @transform_7(%arg0: i32) -> (i32, i32) {
    %c0_i32 = arith.constant 0 : i32
    %c0_i32_0 = arith.constant 0 : i32
    %c0_i32_1 = arith.constant 0 : i32
    return %c0_i32, %c0_i32_0 : i32, i32
  }
  func.func @transform_8(%arg0: i32) -> (i32, i32) {
    %c0_i32 = arith.constant 0 : i32
    %c0_i32_0 = arith.constant 0 : i32
    %c0_i32_1 = arith.constant 0 : i32
    return %c0_i32, %c0_i32_0 : i32, i32
  }
  func.func @transform_9(%arg0: i32) -> (i32, i32) {
    %c0_i32 = arith.constant 0 : i32
    %c0_i32_0 = arith.constant 0 : i32
    return %arg0, %c0_i32 : i32, i32
  }
}

</mosaic_0001>

<llo_original>
// kernel: mlp_post_crnn_pretrained.1
$region0: #{mlp_post_crnn_pretrained.1}
  #allocation0 [shape = 'u32[]', space=smem, size = 0x4, offset = 0x4, fixed_abs, tag = 'smem constant byte address 0x4 - core index']
  #allocation1 [shape = 'u32[144,128]{1,0:T(1,128)}', space=vmem, size = 0x12000, scoped, tag = 'internal scratch']
  %s0 = inlined_call_operand.hbm [shape: f32[2,128], index: 0, kind: input, shape index: {}]
  %s1 = inlined_call_operand.hbm [shape: bf16[128,512], index: 1, kind: input, shape index: {}]
  %s2 = inlined_call_operand.hbm [shape: f32[1,512], index: 2, kind: input, shape index: {}]
  %s3 = inlined_call_operand.hbm [shape: bf16[512,256], index: 3, kind: input, shape index: {}]
  %s4 = inlined_call_operand.hbm [shape: f32[1,256], index: 4, kind: input, shape index: {}]
  %s5 = inlined_call_operand.hbm [shape: bf16[256,128], index: 5, kind: input, shape index: {}]
  %s6 = inlined_call_operand.hbm [shape: f32[1,128], index: 6, kind: input, shape index: {}]
  %s7 = inlined_call_operand.hbm [shape: bf16[128,128], index: 7, kind: input, shape index: {}]
  %s8 = inlined_call_operand.hbm [shape: f32[1,128], index: 8, kind: input, shape index: {}]
  %s9 = inlined_call_operand.hbm [shape: bf16[2,128], index: 9, kind: output, shape index: {}]
  %s10 = sld [smem:[#allocation0]]
  $region82: #{mlp_post_crnn_pretrained.1} parent=0
    _
  %s12 = ssub.s32 1, %s10
  %s13 = scalar_select 0, %s12, %s10
  $region1: #{mlp_post_crnn_pretrained.1} parent=0
    #allocation2 [shape = 'u8[8192]{0}', space=vmem, size = 0x2000, scoped, tag = 'input window, operand 0, single buffered']
    #allocation3 [shape = 's32[1]{0}', space=sflag, size = 0x4, scoped, tag = 'scoped memory for mlp_post_crnn_pretrained.1']
    #allocation4 [shape = 's32[1]{0}', space=sflag, size = 0x4, scoped, tag = 'scoped memory for mlp_post_crnn_pretrained.1']
    #allocation5 [shape = 'u8[131072]{0}', space=vmem, size = 0x20000, scoped, tag = 'input window, operand 1, single buffered']
    #allocation6 [shape = 's32[1]{0}', space=sflag, size = 0x4, scoped, tag = 'scoped memory for mlp_post_crnn_pretrained.1']
    #allocation7 [shape = 'u8[2048]{0}', space=vmem, size = 0x800, scoped, tag = 'input window, operand 2, single buffered']
    #allocation8 [shape = 'u8[262144]{0}', space=vmem, size = 0x40000, scoped, tag = 'input window, operand 3, single buffered']
    #allocation9 [shape = 's32[1]{0}', space=sflag, size = 0x4, scoped, tag = 'scoped memory for mlp_post_crnn_pretrained.1']
    #allocation10 [shape = 'u8[1024]{0}', space=vmem, size = 0x400, scoped, tag = 'input window, operand 4, single buffered']
    #allocation11 [shape = 'u8[65536]{0}', space=vmem, size = 0x10000, scoped, tag = 'input window, operand 5, single buffered']
    #allocation12 [shape = 's32[1]{0}', space=sflag, size = 0x4, scoped, tag = 'scoped memory for mlp_post_crnn_pretrained.1']
    #allocation13 [shape = 'u8[512]{0}', space=vmem, size = 0x400, scoped, tag = 'input window, operand 6, single buffered']
    #allocation14 [shape = 'u8[32768]{0}', space=vmem, size = 0x8000, scoped, tag = 'input window, operand 7, single buffered']
    #allocation15 [shape = 's32[1]{0}', space=sflag, size = 0x4, scoped, tag = 'scoped memory for mlp_post_crnn_pretrained.1']
    #allocation16 [shape = 'u8[512]{0}', space=vmem, size = 0x400, scoped, tag = 'input window, operand 8, single buffered']
    #allocation17 [shape = 'u8[4096]{0}', space=vmem, size = 0x1000, scoped, tag = 'output window, operand 0, single buffered']
    %14 = vsyncpa [#allocation3], 0
    %15 = vsyncpa [#allocation6], 0
    %16 = vsyncpa [#allocation9], 0
    %17 = vsyncpa [#allocation12], 0
    %18 = vsyncpa [#allocation15], 0
    %19 = vsyncpa [#allocation4], 0
    // Predicated region
    $region2: #{mlp_post_crnn_pretrained.1} parent=1 // pred_check
      _
    $region3: #{mlp_post_crnn_pretrained.1} parent=1 // pred_check_branch
      %21 = sbr.rel (0) target = $region5
    $region4: #{mlp_post_crnn_pretrained.1} parent=1 // pred_region
      %s23 = ssub.s32 256, 32
      %24 = vsyncadd [#allocation3], %s23
      %s25 = sshll.u32 [#allocation2], 4
      %s26 = int_to_ptr.vmem [resolvable:$true] %s25
      %31 = dma.hbm_to_vmem [thread:$0]  %s0, 32, %s26, [#allocation3], 32, 32, 2
    $region5: #{mlp_post_crnn_pretrained.1} parent=1 // pred_fallthru
      _
    // Predicated region
    $region6: #{mlp_post_crnn_pretrained.1} parent=1 // pred_check
      _
    $region7: #{mlp_post_crnn_pretrained.1} parent=1 // pred_check_branch
      %33 = sbr.rel (0) target = $region9
    $region8: #{mlp_post_crnn_pretrained.1} parent=1 // pred_region
      %s35 = ssub.s32 4096, 4096
      %36 = vsyncadd [#allocation6], %s35
      %s37 = sshll.u32 [#allocation5], 4
      %s38 = int_to_ptr.vmem [resolvable:$true] %s37
      %43 = dma.hbm_to_vmem [thread:$0]  %s1, 4096, %s38, [#allocation6], 256, 256, 16
    $region9: #{mlp_post_crnn_pretrained.1} parent=1 // pred_fallthru
      _
    // Predicated region
    $region10: #{mlp_post_crnn_pretrained.1} parent=1 // pred_check
      _
    $region11: #{mlp_post_crnn_pretrained.1} parent=1 // pred_check_branch
      %45 = sbr.rel (0) target = $region13
    $region12: #{mlp_post_crnn_pretrained.1} parent=1 // pred_region
      %s47 = ssub.s32 64, 64
      %48 = vsyncadd [#allocation6], %s47
      %s50 = sshll.u32 [#allocation7], 4
      %s51 = int_to_ptr.vmem [resolvable:$true] %s50
      %53 = dma.hbm_to_vmem [thread:$0]  %s2, 64, %s51, [#allocation6]
    $region13: #{mlp_post_crnn_pretrained.1} parent=1 // pred_fallthru
      _
    // Predicated region
    $region14: #{mlp_post_crnn_pretrained.1} parent=1 // pred_check
      _
    $region15: #{mlp_post_crnn_pretrained.1} parent=1 // pred_check_branch
      %55 = sbr.rel (0) target = $region17
    $region16: #{mlp_post_crnn_pretrained.1} parent=1 // pred_region
      %s57 = ssub.s32 8192, 8192
      %58 = vsyncadd [#allocation9], %s57
      %s59 = sshll.u32 [#allocation8], 4
      %s60 = int_to_ptr.vmem [resolvable:$true] %s59
      %65 = dma.hbm_to_vmem [thread:$0]  %s3, 8192, %s60, [#allocation9], 128, 128, 8
    $region17: #{mlp_post_crnn_pretrained.1} parent=1 // pred_fallthru
      _
    // Predicated region
    $region18: #{mlp_post_crnn_pretrained.1} parent=1 // pred_check
      _
    $region19: #{mlp_post_crnn_pretrained.1} parent=1 // pred_check_branch
      %67 = sbr.rel (0) target = $region21
    $region20: #{mlp_post_crnn_pretrained.1} parent=1 // pred_region
      %s69 = ssub.s32 32, 32
      %70 = vsyncadd [#allocation9], %s69
      %s72 = sshll.u32 [#allocation10], 4
      %s73 = int_to_ptr.vmem [resolvable:$true] %s72
      %75 = dma.hbm_to_vmem [thread:$0]  %s4, 32, %s73, [#allocation9]
    $region21: #{mlp_post_crnn_pretrained.1} parent=1 // pred_fallthru
      _
    // Predicated region
    $region22: #{mlp_post_crnn_pretrained.1} parent=1 // pred_check
      _
    $region23: #{mlp_post_crnn_pretrained.1} parent=1 // pred_check_branch
      %77 = sbr.rel (0) target = $region25
    $region24: #{mlp_post_crnn_pretrained.1} parent=1 // pred_region
      %s79 = ssub.s32 2048, 2048
      %80 = vsyncadd [#allocation12], %s79
      %s81 = sshll.u32 [#allocation11], 4
      %s82 = int_to_ptr.vmem [resolvable:$true] %s81
      %87 = dma.hbm_to_vmem [thread:$0]  %s5, 2048, %s82, [#allocation12], 64, 64, 4
    $region25: #{mlp_post_crnn_pretrained.1} parent=1 // pred_fallthru
      _
    // Predicated region
    $region26: #{mlp_post_crnn_pretrained.1} parent=1 // pred_check
      _
    $region27: #{mlp_post_crnn_pretrained.1} parent=1 // pred_check_branch
      %89 = sbr.rel (0) target = $region29
    $region28: #{mlp_post_crnn_pretrained.1} parent=1 // pred_region
      %s91 = ssub.s32 16, 16
      %92 = vsyncadd [#allocation12], %s91
      %s94 = sshll.u32 [#allocation13], 4
      %s95 = int_to_ptr.vmem [resolvable:$true] %s94
      %97 = dma.hbm_to_vmem [thread:$0]  %s6, 16, %s95, [#allocation12]
    $region29: #{mlp_post_crnn_pretrained.1} parent=1 // pred_fallthru
      _
    // Predicated region
    $region30: #{mlp_post_crnn_pretrained.1} parent=1 // pred_check
      _
    $region31: #{mlp_post_crnn_pretrained.1} parent=1 // pred_check_branch
      %99 = sbr.rel (0) target = $region33
    $region32: #{mlp_post_crnn_pretrained.1} parent=1 // pred_region
      %s101 = ssub.s32 1024, 1024
      %102 = vsyncadd [#allocation15], %s101
      %s103 = sshll.u32 [#allocation14], 4
      %s104 = int_to_ptr.vmem [resolvable:$true] %s103
      %109 = dma.hbm_to_vmem [thread:$0]  %s7, 1024, %s104, [#allocation15], 64, 64, 4
    $region33: #{mlp_post_crnn_pretrained.1} parent=1 // pred_fallthru
      _
    // Predicated region
    $region34: #{mlp_post_crnn_pretrained.1} parent=1 // pred_check
      _
    $region35: #{mlp_post_crnn_pretrained.1} parent=1 // pred_check_branch
      %111 = sbr.rel (0) target = $region37
    $region36: #{mlp_post_crnn_pretrained.1} parent=1 // pred_region
      %s113 = ssub.s32 16, 16
      %114 = vsyncadd [#allocation15], %s113
      %s116 = sshll.u32 [#allocation16], 4
      %s117 = int_to_ptr.vmem [resolvable:$true] %s116
      %119 = dma.hbm_to_vmem [thread:$0]  %s8, 16, %s117, [#allocation15]
    $region37: #{mlp_post_crnn_pretrained.1} parent=1 // pred_fallthru
      _
    // Predicated region
    $region38: #{mlp_post_crnn_pretrained.1} parent=1 // pred_check
      _
    $region39: #{mlp_post_crnn_pretrained.1} parent=1 // pred_check_branch
      %121 = sbr.rel (0) target = $region41
    $region40: #{mlp_post_crnn_pretrained.1} parent=1 // pred_region
      %122 = dma.done [#allocation3], 256
    $region41: #{mlp_post_crnn_pretrained.1} parent=1 // pred_fallthru
      _
    // Predicated region
    $region42: #{mlp_post_crnn_pretrained.1} parent=1 // pred_check
      _
    $region43: #{mlp_post_crnn_pretrained.1} parent=1 // pred_check_branch
      %124 = sbr.rel (0) target = $region45
    $region44: #{mlp_post_crnn_pretrained.1} parent=1 // pred_region
      %125 = dma.done [#allocation6], 4096
    $region45: #{mlp_post_crnn_pretrained.1} parent=1 // pred_fallthru
      _
    // Predicated region
    $region46: #{mlp_post_crnn_pretrained.1} parent=1 // pred_check
      _
    $region47: #{mlp_post_crnn_pretrained.1} parent=1 // pred_check_branch
      %127 = sbr.rel (0) target = $region49
    $region48: #{mlp_post_crnn_pretrained.1} parent=1 // pred_region
      %128 = dma.done [#allocation6], 64
    $region49: #{mlp_post_crnn_pretrained.1} parent=1 // pred_fallthru
      _
    // Predicated region
    $region50: #{mlp_post_crnn_pretrained.1} parent=1 // pred_check
      _
    $region51: #{mlp_post_crnn_pretrained.1} parent=1 // pred_check_branch
      %130 = sbr.rel (0) target = $region53
    $region52: #{mlp_post_crnn_pretrained.1} parent=1 // pred_region
      %131 = dma.done [#allocation9], 8192
    $region53: #{mlp_post_crnn_pretrained.1} parent=1 // pred_fallthru
      _
    // Predicated region
    $region54: #{mlp_post_crnn_pretrained.1} parent=1 // pred_check
      _
    $region55: #{mlp_post_crnn_pretrained.1} parent=1 // pred_check_branch
      %133 = sbr.rel (0) target = $region57
    $region56: #{mlp_post_crnn_pretrained.1} parent=1 // pred_region
      %134 = dma.done [#allocation9], 32
    $region57: #{mlp_post_crnn_pretrained.1} parent=1 // pred_fallthru
      _
    // Predicated region
    $region58: #{mlp_post_crnn_pretrained.1} parent=1 // pred_check
      _
    $region59: #{mlp_post_crnn_pretrained.1} parent=1 // pred_check_branch
      %136 = sbr.rel (0) target = $region61
    $region60: #{mlp_post_crnn_pretrained.1} parent=1 // pred_region
      %137 = dma.done [#allocation12], 2048
    $region61: #{mlp_post_crnn_pretrained.1} parent=1 // pred_fallthru
      _
    // Predicated region
    $region62: #{mlp_post_crnn_pretrained.1} parent=1 // pred_check
      _
    $region63: #{mlp_post_crnn_pretrained.1} parent=1 // pred_check_branch
      %139 = sbr.rel (0) target = $region65
    $region64: #{mlp_post_crnn_pretrained.1} parent=1 // pred_region
      %140 = dma.done [#allocation12], 16
    $region65: #{mlp_post_crnn_pretrained.1} parent=1 // pred_fallthru
      _
    // Predicated region
    $region66: #{mlp_post_crnn_pretrained.1} parent=1 // pred_check
      _
    $region67: #{mlp_post_crnn_pretrained.1} parent=1 // pred_check_branch
      %142 = sbr.rel (0) target = $region69
    $region68: #{mlp_post_crnn_pretrained.1} parent=1 // pred_region
      %143 = dma.done [#allocation15], 1024
    $region69: #{mlp_post_crnn_pretrained.1} parent=1 // pred_fallthru
      _
    // Predicated region
    $region70: #{mlp_post_crnn_pretrained.1} parent=1 // pred_check
      _
    $region71: #{mlp_post_crnn_pretrained.1} parent=1 // pred_check_branch
      %145 = sbr.rel (0) target = $region73
    $region72: #{mlp_post_crnn_pretrained.1} parent=1 // pred_region
      %146 = dma.done [#allocation15], 16
    $region73: #{mlp_post_crnn_pretrained.1} parent=1 // pred_fallthru
      _
    %v148 = vld [vmem:[#allocation2] sm:$0xff]
    %v149 = vld [vmem:[#allocation2 + $0x8] sm:$0xff]
    %v150 = vpack.c.bf16 %v149, %v148
    %v151 = vld [vmem:[#allocation5] sm:$0xff]
    %v152 = vld [vmem:[#allocation5 + $0x8] sm:$0xff]
    %v153 = vld [vmem:[#allocation5 + $0x10] sm:$0xff]
    %v154 = vld [vmem:[#allocation5 + $0x18] sm:$0xff]
    %v155 = vld [vmem:[#allocation5 + $0x20] sm:$0xff]
    %v156 = vld [vmem:[#allocation5 + $0x28] sm:$0xff]
    %v157 = vld [vmem:[#allocation5 + $0x30] sm:$0xff]
    %v158 = vld [vmem:[#allocation5 + $0x38] sm:$0xff]
    %v159 = vld [vmem:[#allocation5 + $0x40] sm:$0xff]
    %v160 = vld [vmem:[#allocation5 + $0x48] sm:$0xff]
    %v161 = vld [vmem:[#allocation5 + $0x50] sm:$0xff]
    %v162 = vld [vmem:[#allocation5 + $0x58] sm:$0xff]
    %v163 = vld [vmem:[#allocation5 + $0x60] sm:$0xff]
    %v164 = vld [vmem:[#allocation5 + $0x68] sm:$0xff]
    %v165 = vld [vmem:[#allocation5 + $0x70] sm:$0xff]
    %v166 = vld [vmem:[#allocation5 + $0x78] sm:$0xff]
    %v167 = vld [vmem:[#allocation5 + $0x80] sm:$0xff]
    %v168 = vld [vmem:[#allocation5 + $0x88] sm:$0xff]
    %v169 = vld [vmem:[#allocation5 + $0x90] sm:$0xff]
    %v170 = vld [vmem:[#allocation5 + $0x98] sm:$0xff]
    %v171 = vld [vmem:[#allocation5 + $0xa0] sm:$0xff]
    %v172 = vld [vmem:[#allocation5 + $0xa8] sm:$0xff]
    %v173 = vld [vmem:[#allocation5 + $0xb0] sm:$0xff]
    %v174 = vld [vmem:[#allocation5 + $0xb8] sm:$0xff]
    %v175 = vld [vmem:[#allocation5 + $0xc0] sm:$0xff]
    %v176 = vld [vmem:[#allocation5 + $0xc8] sm:$0xff]
    %v177 = vld [vmem:[#allocation5 + $0xd0] sm:$0xff]
    %v178 = vld [vmem:[#allocation5 + $0xd8] sm:$0xff]
    %v179 = vld [vmem:[#allocation5 + $0xe0] sm:$0xff]
    %v180 = vld [vmem:[#allocation5 + $0xe8] sm:$0xff]
    %v181 = vld [vmem:[#allocation5 + $0xf0] sm:$0xff]
    %v182 = vld [vmem:[#allocation5 + $0xf8] sm:$0xff]
    %v183 = vld [vmem:[#allocation7] sm:$0xf]
    %v185 = vlaneseq
    %v186 = vshrl.u32 %v185, 7
    %v187 = vsub.s32 0, %v186
    %v188 = vrot.slane %v183, %v187
    %v189 = vlaneseq
    %v190 = vshrl.u32 %v189, 7
    %v191 = vsub.s32 1, %v190
    %v192 = vrot.slane %v183, %v191
    %v193 = vlaneseq
    %v194 = vshrl.u32 %v193, 7
    %v195 = vsub.s32 2, %v194
    %v196 = vrot.slane %v183, %v195
    %v197 = vlaneseq
    %v198 = vshrl.u32 %v197, 7
    %v199 = vsub.s32 3, %v198
    %v200 = vrot.slane %v183, %v199
    %v237 = vunpack.c.l.b16 %v151
    %v238 = vunpack.c.h.b16 %v151
    %v239 = vunpack.c.l.b16 %v152
    %v240 = vunpack.c.h.b16 %v152
    %v241 = vunpack.c.l.b16 %v153
    %v242 = vunpack.c.h.b16 %v153
    %v243 = vunpack.c.l.b16 %v154
    %v244 = vunpack.c.h.b16 %v154
    %v245 = vunpack.c.l.b16 %v155
    %v246 = vunpack.c.h.b16 %v155
    %v247 = vunpack.c.l.b16 %v156
    %v248 = vunpack.c.h.b16 %v156
    %v249 = vunpack.c.l.b16 %v157
    %v250 = vunpack.c.h.b16 %v157
    %v251 = vunpack.c.l.b16 %v158
    %v252 = vunpack.c.h.b16 %v158
    %v253 = vunpack.c.l.b16 %v159
    %v254 = vunpack.c.h.b16 %v159
    %v255 = vunpack.c.l.b16 %v160
    %v256 = vunpack.c.h.b16 %v160
    %v257 = vunpack.c.l.b16 %v161
    %v258 = vunpack.c.h.b16 %v161
    %v259 = vunpack.c.l.b16 %v162
    %v260 = vunpack.c.h.b16 %v162
    %v261 = vunpack.c.l.b16 %v163
    %v262 = vunpack.c.h.b16 %v163
    %v263 = vunpack.c.l.b16 %v164
    %v264 = vunpack.c.h.b16 %v164
    %v265 = vunpack.c.l.b16 %v165
    %v266 = vunpack.c.h.b16 %v165
    %v267 = vunpack.c.l.b16 %v166
    %v268 = vunpack.c.h.b16 %v166
    %v269 = vunpack.c.l.b16 %v167
    %v270 = vunpack.c.h.b16 %v167
    %v271 = vunpack.c.l.b16 %v168
    %v272 = vunpack.c.h.b16 %v168
    %v273 = vunpack.c.l.b16 %v169
    %v274 = vunpack.c.h.b16 %v169
    %v275 = vunpack.c.l.b16 %v170
    %v276 = vunpack.c.h.b16 %v170
    %v277 = vunpack.c.l.b16 %v171
    %v278 = vunpack.c.h.b16 %v171
    %v279 = vunpack.c.l.b16 %v172
    %v280 = vunpack.c.h.b16 %v172
    %v281 = vunpack.c.l.b16 %v173
    %v282 = vunpack.c.h.b16 %v173
    %v283 = vunpack.c.l.b16 %v174
    %v284 = vunpack.c.h.b16 %v174
    %v285 = vunpack.c.l.b16 %v175
    %v286 = vunpack.c.h.b16 %v175
    %v287 = vunpack.c.l.b16 %v176
    %v288 = vunpack.c.h.b16 %v176
    %v289 = vunpack.c.l.b16 %v177
    %v290 = vunpack.c.h.b16 %v177
    %v291 = vunpack.c.l.b16 %v178
    %v292 = vunpack.c.h.b16 %v178
    %v293 = vunpack.c.l.b16 %v179
    %v294 = vunpack.c.h.b16 %v179
    %v295 = vunpack.c.l.b16 %v180
    %v296 = vunpack.c.h.b16 %v180
    %v297 = vunpack.c.l.b16 %v181
    %v298 = vunpack.c.h.b16 %v181
    %v299 = vunpack.c.l.b16 %v182
    %v300 = vunpack.c.h.b16 %v182
    %v301 = vpack.c.b16 %v241, %v237
    %v302 = vpack.c.b16 %v242, %v238
    %v303 = vpack.c.b16 %v243, %v239
    %v304 = vpack.c.b16 %v244, %v240
    %v305 = vpack.c.b16 %v249, %v245
    %v306 = vpack.c.b16 %v250, %v246
    %v307 = vpack.c.b16 %v251, %v247
    %v308 = vpack.c.b16 %v252, %v248
    %v309 = vpack.c.b16 %v257, %v253
    %v310 = vpack.c.b16 %v258, %v254
    %v311 = vpack.c.b16 %v259, %v255
    %v312 = vpack.c.b16 %v260, %v256
    %v313 = vpack.c.b16 %v265, %v261
    %v314 = vpack.c.b16 %v266, %v262
    %v315 = vpack.c.b16 %v267, %v263
    %v316 = vpack.c.b16 %v268, %v264
    %v317 = vpack.c.b16 %v273, %v269
    %v318 = vpack.c.b16 %v274, %v270
    %v319 = vpack.c.b16 %v275, %v271
    %v320 = vpack.c.b16 %v276, %v272
    %v321 = vpack.c.b16 %v281, %v277
    %v322 = vpack.c.b16 %v282, %v278
    %v323 = vpack.c.b16 %v283, %v279
    %v324 = vpack.c.b16 %v284, %v280
    %v325 = vpack.c.b16 %v289, %v285
    %v326 = vpack.c.b16 %v290, %v286
    %v327 = vpack.c.b16 %v291, %v287
    %v328 = vpack.c.b16 %v292, %v288
    %v329 = vpack.c.b16 %v297, %v293
    %v330 = vpack.c.b16 %v298, %v294
    %v331 = vpack.c.b16 %v299, %v295
    %v332 = vpack.c.b16 %v300, %v296
    %365 = vmatprep.subr.bf16.mxu0 %v302
    %366 = vmatpush1.bf16.msra.mxu0 %v301
    %367 = vmatprep.subr.bf16.mxu0 %v306
    %368 = vmatpush1.bf16.msra.mxu0 %v305
    %369 = vmatprep.subr.bf16.mxu0 %v310
    %370 = vmatpush1.bf16.msra.mxu0 %v309
    %371 = vmatprep.subr.bf16.mxu0 %v314
    %372 = vmatpush1.bf16.msra.mxu0 %v313
    %373 = vmatprep.subr.bf16.mxu0 %v318
    %374 = vmatpush1.bf16.msra.mxu0 %v317
    %375 = vmatprep.subr.bf16.mxu0 %v322
    %376 = vmatpush1.bf16.msra.mxu0 %v321
    %377 = vmatprep.subr.bf16.mxu0 %v326
    %378 = vmatpush1.bf16.msra.mxu0 %v325
    %379 = vmatprep.subr.bf16.mxu0 %v330
    %380 = vmatpush1.bf16.msra.mxu0 %v329
    %381 = vmatprep.subr.bf16.mxu0 0
    %382 = vmatpush1.bf16.msra.mxu0 0
    %383 = vmatprep.subr.bf16.mxu0 0
    %384 = vmatpush1.bf16.msra.mxu0 0
    %385 = vmatprep.subr.bf16.mxu0 0
    %386 = vmatpush1.bf16.msra.mxu0 0
    %387 = vmatprep.subr.bf16.mxu0 0
    %388 = vmatpush1.bf16.msra.mxu0 0
    %389 = vmatprep.subr.bf16.mxu0 0
    %390 = vmatpush1.bf16.msra.mxu0 0
    %391 = vmatprep.subr.bf16.mxu0 0
    %392 = vmatpush1.bf16.msra.mxu0 0
    %393 = vmatprep.subr.bf16.mxu0 0
    %394 = vmatpush1.bf16.msra.mxu0 0
    %395 = vmatprep.subr.bf16.mxu0 0
    %396 = vmatpush1.bf16.msra.mxu0 0
    %397 = vmatprep.mubr.bf16.mxu0 0
    %398 = vmatmul.mubr.bf16.gmra.mrb[0].mxu0 %v150
    %v399 = vpop.f32.mrb[0].mxu0
    %v400 = vadd.f32 %v188, %v399
    %v401 = vpop.f32.mrb[0].mxu0
    %v402 = vadd.f32 %v192, %v401
    %v403 = vpop.f32.mrb[0].mxu0
    %v404 = vadd.f32 %v188, %v403
    %v405 = vpop.f32.mrb[0].mxu0
    %v406 = vadd.f32 %v192, %v405
    %407 = vdwg.mxu0
    %408 = vmatprep.subr.bf16.mxu0 %v304
    %409 = vmatpush1.bf16.msra.mxu0 %v303
    %410 = vmatprep.subr.bf16.mxu0 %v308
    %411 = vmatpush1.bf16.msra.mxu0 %v307
    %412 = vmatprep.subr.bf16.mxu0 %v312
    %413 = vmatpush1.bf16.msra.mxu0 %v311
    %414 = vmatprep.subr.bf16.mxu0 %v316
    %415 = vmatpush1.bf16.msra.mxu0 %v315
    %416 = vmatprep.subr.bf16.mxu0 %v320
    %417 = vmatpush1.bf16.msra.mxu0 %v319
    %418 = vmatprep.subr.bf16.mxu0 %v324
    %419 = vmatpush1.bf16.msra.mxu0 %v323
    %420 = vmatprep.subr.bf16.mxu0 %v328
    %421 = vmatpush1.bf16.msra.mxu0 %v327
    %422 = vmatprep.subr.bf16.mxu0 %v332
    %423 = vmatpush1.bf16.msra.mxu0 %v331
    %424 = vmatprep.subr.bf16.mxu0 0
    %425 = vmatpush1.bf16.msra.mxu0 0
    %426 = vmatprep.subr.bf16.mxu0 0
    %427 = vmatpush1.bf16.msra.mxu0 0
    %428 = vmatprep.subr.bf16.mxu0 0
    %429 = vmatpush1.bf16.msra.mxu0 0
    %430 = vmatprep.subr.bf16.mxu0 0
    %431 = vmatpush1.bf16.msra.mxu0 0
    %432 = vmatprep.subr.bf16.mxu0 0
    %433 = vmatpush1.bf16.msra.mxu0 0
    %434 = vmatprep.subr.bf16.mxu0 0
    %435 = vmatpush1.bf16.msra.mxu0 0
    %436 = vmatprep.subr.bf16.mxu0 0
    %437 = vmatpush1.bf16.msra.mxu0 0
    %438 = vmatprep.subr.bf16.mxu0 0
    %439 = vmatpush1.bf16.msra.mxu0 0
    %440 = vmatprep.mubr.bf16.mxu0 0
    %441 = vmatmul.mubr.bf16.gmra.mrb[0].mxu0 %v150
    %v442 = vpop.f32.mrb[0].mxu0
    %v443 = vadd.f32 %v196, %v442
    %v444 = vpop.f32.mrb[0].mxu0
    %v445 = vadd.f32 %v200, %v444
    %v446 = vpop.f32.mrb[0].mxu0
    %v447 = vadd.f32 %v196, %v446
    %v448 = vpop.f32.mrb[0].mxu0
    %v449 = vadd.f32 %v200, %v448
    %450 = vdwg.mxu0
    %v451 = vmax.f32 %v400, 0.0
    %v452 = vmax.f32 %v402, 0.0
    %v453 = vmax.f32 %v443, 0.0
    %v454 = vmax.f32 %v445, 0.0
    %v455 = vmax.f32 %v404, 0.0
    %v456 = vmax.f32 %v406, 0.0
    %v457 = vmax.f32 %v447, 0.0
    %v458 = vmax.f32 %v449, 0.0
    %v459 = vpack.c.bf16 %v455, %v451
    %v460 = vpack.c.bf16 %v456, %v452
    %v461 = vpack.c.bf16 %v457, %v453
    %v462 = vpack.c.bf16 %v458, %v454
    %v463 = vld [vmem:[#allocation8] sm:$0xff]
    %v464 = vld [vmem:[#allocation8 + $0x8] sm:$0xff]
    %v465 = vld [vmem:[#allocation8 + $0x10] sm:$0xff]
    %v466 = vld [vmem:[#allocation8 + $0x18] sm:$0xff]
    %v467 = vld [vmem:[#allocation8 + $0x20] sm:$0xff]
    %v468 = vld [vmem:[#allocation8 + $0x28] sm:$0xff]
    %v469 = vld [vmem:[#allocation8 + $0x30] sm:$0xff]
    %v470 = vld [vmem:[#allocation8 + $0x38] sm:$0xff]
    %v471 = vld [vmem:[#allocation8 + $0x40] sm:$0xff]
    %v472 = vld [vmem:[#allocation8 + $0x48] sm:$0xff]
    %v473 = vld [vmem:[#allocation8 + $0x50] sm:$0xff]
    %v474 = vld [vmem:[#allocation8 + $0x58] sm:$0xff]
    %v475 = vld [vmem:[#allocation8 + $0x60] sm:$0xff]
    %v476 = vld [vmem:[#allocation8 + $0x68] sm:$0xff]
    %v477 = vld [vmem:[#allocation8 + $0x70] sm:$0xff]
    %v478 = vld [vmem:[#allocation8 + $0x78] sm:$0xff]
    %v479 = vld [vmem:[#allocation8 + $0x80] sm:$0xff]
    %v480 = vld [vmem:[#allocation8 + $0x88] sm:$0xff]
    %v481 = vld [vmem:[#allocation8 + $0x90] sm:$0xff]
    %v482 = vld [vmem:[#allocation8 + $0x98] sm:$0xff]
    %v483 = vld [vmem:[#allocation8 + $0xa0] sm:$0xff]
    %v484 = vld [vmem:[#allocation8 + $0xa8] sm:$0xff]
    %v485 = vld [vmem:[#allocation8 + $0xb0] sm:$0xff]
    %v486 = vld [vmem:[#allocation8 + $0xb8] sm:$0xff]
    %v487 = vld [vmem:[#allocation8 + $0xc0] sm:$0xff]
    %v488 = vld [vmem:[#allocation8 + $0xc8] sm:$0xff]
    %v489 = vld [vmem:[#allocation8 + $0xd0] sm:$0xff]
    %v490 = vld [vmem:[#allocation8 + $0xd8] sm:$0xff]
    %v491 = vld [vmem:[#allocation8 + $0xe0] sm:$0xff]
    %v492 = vld [vmem:[#allocation8 + $0xe8] sm:$0xff]
    %v493 = vld [vmem:[#allocation8 + $0xf0] sm:$0xff]
    %v494 = vld [vmem:[#allocation8 + $0xf8] sm:$0xff]
    %v495 = vld [vmem:[#allocation8 + $0x100] sm:$0xff]
    %v496 = vld [vmem:[#allocation8 + $0x108] sm:$0xff]
    %v497 = vld [vmem:[#allocation8 + $0x110] sm:$0xff]
    %v498 = vld [vmem:[#allocation8 + $0x118] sm:$0xff]
    %v499 = vld [vmem:[#allocation8 + $0x120] sm:$0xff]
    %v500 = vld [vmem:[#allocation8 + $0x128] sm:$0xff]
    %v501 = vld [vmem:[#allocation8 + $0x130] sm:$0xff]
    %v502 = vld [vmem:[#allocation8 + $0x138] sm:$0xff]
    %v503 = vld [vmem:[#allocation8 + $0x140] sm:$0xff]
    %v504 = vld [vmem:[#allocation8 + $0x148] sm:$0xff]
    %v505 = vld [vmem:[#allocation8 + $0x150] sm:$0xff]
    %v506 = vld [vmem:[#allocation8 + $0x158] sm:$0xff]
    %v507 = vld [vmem:[#allocation8 + $0x160] sm:$0xff]
    %v508 = vld [vmem:[#allocation8 + $0x168] sm:$0xff]
    %v509 = vld [vmem:[#allocation8 + $0x170] sm:$0xff]
    %v510 = vld [vmem:[#allocation8 + $0x178] sm:$0xff]
    %v511 = vld [vmem:[#allocation8 + $0x180] sm:$0xff]
    %v512 = vld [vmem:[#allocation8 + $0x188] sm:$0xff]
    %v513 = vld [vmem:[#allocation8 + $0x190] sm:$0xff]
    %v514 = vld [vmem:[#allocation8 + $0x198] sm:$0xff]
    %v515 = vld [vmem:[#allocation8 + $0x1a0] sm:$0xff]
    %v516 = vld [vmem:[#allocation8 + $0x1a8] sm:$0xff]
    %v517 = vld [vmem:[#allocation8 + $0x1b0] sm:$0xff]
    %v518 = vld [vmem:[#allocation8 + $0x1b8] sm:$0xff]
    %v519 = vld [vmem:[#allocation8 + $0x1c0] sm:$0xff]
    %v520 = vld [vmem:[#allocation8 + $0x1c8] sm:$0xff]
    %v521 = vld [vmem:[#allocation8 + $0x1d0] sm:$0xff]
    %v522 = vld [vmem:[#allocation8 + $0x1d8] sm:$0xff]
    %v523 = vld [vmem:[#allocation8 + $0x1e0] sm:$0xff]
    %v524 = vld [vmem:[#allocation8 + $0x1e8] sm:$0xff]
    %v525 = vld [vmem:[#allocation8 + $0x1f0] sm:$0xff]
    %v526 = vld [vmem:[#allocation8 + $0x1f8] sm:$0xff]
    %v527 = vld [vmem:[#allocation10] sm:$0x3]
    %v529 = vlaneseq
    %v530 = vshrl.u32 %v529, 7
    %v531 = vsub.s32 0, %v530
    %v532 = vrot.slane %v527, %v531
    %v533 = vlaneseq
    %v534 = vshrl.u32 %v533, 7
    %v535 = vsub.s32 1, %v534
    %v536 = vrot.slane %v527, %v535
    %v603 = vunpack.c.l.b16 %v463
    %v604 = vunpack.c.h.b16 %v463
    %v605 = vunpack.c.l.b16 %v464
    %v606 = vunpack.c.h.b16 %v464
    %v607 = vunpack.c.l.b16 %v465
    %v608 = vunpack.c.h.b16 %v465
    %v609 = vunpack.c.l.b16 %v466
    %v610 = vunpack.c.h.b16 %v466
    %v611 = vunpack.c.l.b16 %v467
    %v612 = vunpack.c.h.b16 %v467
    %v613 = vunpack.c.l.b16 %v468
    %v614 = vunpack.c.h.b16 %v468
    %v615 = vunpack.c.l.b16 %v469
    %v616 = vunpack.c.h.b16 %v469
    %v617 = vunpack.c.l.b16 %v470
    %v618 = vunpack.c.h.b16 %v470
    %v619 = vunpack.c.l.b16 %v471
    %v620 = vunpack.c.h.b16 %v471
    %v621 = vunpack.c.l.b16 %v472
    %v622 = vunpack.c.h.b16 %v472
    %v623 = vunpack.c.l.b16 %v473
    %v624 = vunpack.c.h.b16 %v473
    %v625 = vunpack.c.l.b16 %v474
    %v626 = vunpack.c.h.b16 %v474
    %v627 = vunpack.c.l.b16 %v475
    %v628 = vunpack.c.h.b16 %v475
    %v629 = vunpack.c.l.b16 %v476
    %v630 = vunpack.c.h.b16 %v476
    %v631 = vunpack.c.l.b16 %v477
    %v632 = vunpack.c.h.b16 %v477
    %v633 = vunpack.c.l.b16 %v478
    %v634 = vunpack.c.h.b16 %v478
    %v635 = vunpack.c.l.b16 %v479
    %v636 = vunpack.c.h.b16 %v479
    %v637 = vunpack.c.l.b16 %v480
    %v638 = vunpack.c.h.b16 %v480
    %v639 = vunpack.c.l.b16 %v481
    %v640 = vunpack.c.h.b16 %v481
    %v641 = vunpack.c.l.b16 %v482
    %v642 = vunpack.c.h.b16 %v482
    %v643 = vunpack.c.l.b16 %v483
    %v644 = vunpack.c.h.b16 %v483
    %v645 = vunpack.c.l.b16 %v484
    %v646 = vunpack.c.h.b16 %v484
    %v647 = vunpack.c.l.b16 %v485
    %v648 = vunpack.c.h.b16 %v485
    %v649 = vunpack.c.l.b16 %v486
    %v650 = vunpack.c.h.b16 %v486
    %v651 = vunpack.c.l.b16 %v487
    %v652 = vunpack.c.h.b16 %v487
    %v653 = vunpack.c.l.b16 %v488
    %v654 = vunpack.c.h.b16 %v488
    %v655 = vunpack.c.l.b16 %v489
    %v656 = vunpack.c.h.b16 %v489
    %v657 = vunpack.c.l.b16 %v490
    %v658 = vunpack.c.h.b16 %v490
    %v659 = vunpack.c.l.b16 %v491
    %v660 = vunpack.c.h.b16 %v491
    %v661 = vunpack.c.l.b16 %v492
    %v662 = vunpack.c.h.b16 %v492
    %v663 = vunpack.c.l.b16 %v493
    %v664 = vunpack.c.h.b16 %v493
    %v665 = vunpack.c.l.b16 %v494
    %v666 = vunpack.c.h.b16 %v494
    %v667 = vunpack.c.l.b16 %v495
    %v668 = vunpack.c.h.b16 %v495
    %v669 = vunpack.c.l.b16 %v496
    %v670 = vunpack.c.h.b16 %v496
    %v671 = vunpack.c.l.b16 %v497
    %v672 = vunpack.c.h.b16 %v497
    %v673 = vunpack.c.l.b16 %v498
    %v674 = vunpack.c.h.b16 %v498
    %v675 = vunpack.c.l.b16 %v499
    %v676 = vunpack.c.h.b16 %v499
    %v677 = vunpack.c.l.b16 %v500
    %v678 = vunpack.c.h.b16 %v500
    %v679 = vunpack.c.l.b16 %v501
    %v680 = vunpack.c.h.b16 %v501
    %v681 = vunpack.c.l.b16 %v502
    %v682 = vunpack.c.h.b16 %v502
    %v683 = vunpack.c.l.b16 %v503
    %v684 = vunpack.c.h.b16 %v503
    %v685 = vunpack.c.l.b16 %v504
    %v686 = vunpack.c.h.b16 %v504
    %v687 = vunpack.c.l.b16 %v505
    %v688 = vunpack.c.h.b16 %v505
    %v689 = vunpack.c.l.b16 %v506
    %v690 = vunpack.c.h.b16 %v506
    %v691 = vunpack.c.l.b16 %v507
    %v692 = vunpack.c.h.b16 %v507
    %v693 = vunpack.c.l.b16 %v508
    %v694 = vunpack.c.h.b16 %v508
    %v695 = vunpack.c.l.b16 %v509
    %v696 = vunpack.c.h.b16 %v509
    %v697 = vunpack.c.l.b16 %v510
    %v698 = vunpack.c.h.b16 %v510
    %v699 = vunpack.c.l.b16 %v511
    %v700 = vunpack.c.h.b16 %v511
    %v701 = vunpack.c.l.b16 %v512
    %v702 = vunpack.c.h.b16 %v512
    %v703 = vunpack.c.l.b16 %v513
    %v704 = vunpack.c.h.b16 %v513
    %v705 = vunpack.c.l.b16 %v514
    %v706 = vunpack.c.h.b16 %v514
    %v707 = vunpack.c.l.b16 %v515
    %v708 = vunpack.c.h.b16 %v515
    %v709 = vunpack.c.l.b16 %v516
    %v710 = vunpack.c.h.b16 %v516
    %v711 = vunpack.c.l.b16 %v517
    %v712 = vunpack.c.h.b16 %v517
    %v713 = vunpack.c.l.b16 %v518
    %v714 = vunpack.c.h.b16 %v518
    %v715 = vunpack.c.l.b16 %v519
    %v716 = vunpack.c.h.b16 %v519
    %v717 = vunpack.c.l.b16 %v520
    %v718 = vunpack.c.h.b16 %v520
    %v719 = vunpack.c.l.b16 %v521
    %v720 = vunpack.c.h.b16 %v521
    %v721 = vunpack.c.l.b16 %v522
    %v722 = vunpack.c.h.b16 %v522
    %v723 = vunpack.c.l.b16 %v523
    %v724 = vunpack.c.h.b16 %v523
    %v725 = vunpack.c.l.b16 %v524
    %v726 = vunpack.c.h.b16 %v524
    %v727 = vunpack.c.l.b16 %v525
    %v728 = vunpack.c.h.b16 %v525
    %v729 = vunpack.c.l.b16 %v526
    %v730 = vunpack.c.h.b16 %v526
    %v731 = vpack.c.b16 %v605, %v603
    %v732 = vpack.c.b16 %v606, %v604
    %v733 = vpack.c.b16 %v609, %v607
    %v734 = vpack.c.b16 %v610, %v608
    %v735 = vpack.c.b16 %v613, %v611
    %v736 = vpack.c.b16 %v614, %v612
    %v737 = vpack.c.b16 %v617, %v615
    %v738 = vpack.c.b16 %v618, %v616
    %v739 = vpack.c.b16 %v621, %v619
    %v740 = vpack.c.b16 %v622, %v620
    %v741 = vpack.c.b16 %v625, %v623
    %v742 = vpack.c.b16 %v626, %v624
    %v743 = vpack.c.b16 %v629, %v627
    %v744 = vpack.c.b16 %v630, %v628
    %v745 = vpack.c.b16 %v633, %v631
    %v746 = vpack.c.b16 %v634, %v632
    %v747 = vpack.c.b16 %v637, %v635
    %v748 = vpack.c.b16 %v638, %v636
    %v749 = vpack.c.b16 %v641, %v639
    %v750 = vpack.c.b16 %v642, %v640
    %v751 = vpack.c.b16 %v645, %v643
    %v752 = vpack.c.b16 %v646, %v644
    %v753 = vpack.c.b16 %v649, %v647
    %v754 = vpack.c.b16 %v650, %v648
    %v755 = vpack.c.b16 %v653, %v651
    %v756 = vpack.c.b16 %v654, %v652
    %v757 = vpack.c.b16 %v657, %v655
    %v758 = vpack.c.b16 %v658, %v656
    %v759 = vpack.c.b16 %v661, %v659
    %v760 = vpack.c.b16 %v662, %v660
    %v761 = vpack.c.b16 %v665, %v663
    %v762 = vpack.c.b16 %v666, %v664
    %v763 = vpack.c.b16 %v669, %v667
    %v764 = vpack.c.b16 %v670, %v668
    %v765 = vpack.c.b16 %v673, %v671
    %v766 = vpack.c.b16 %v674, %v672
    %v767 = vpack.c.b16 %v677, %v675
    %v768 = vpack.c.b16 %v678, %v676
    %v769 = vpack.c.b16 %v681, %v679
    %v770 = vpack.c.b16 %v682, %v680
    %v771 = vpack.c.b16 %v685, %v683
    %v772 = vpack.c.b16 %v686, %v684
    %v773 = vpack.c.b16 %v689, %v687
    %v774 = vpack.c.b16 %v690, %v688
    %v775 = vpack.c.b16 %v693, %v691
    %v776 = vpack.c.b16 %v694, %v692
    %v777 = vpack.c.b16 %v697, %v695
    %v778 = vpack.c.b16 %v698, %v696
    %v779 = vpack.c.b16 %v701, %v699
    %v780 = vpack.c.b16 %v702, %v700
    %v781 = vpack.c.b16 %v705, %v703
    %v782 = vpack.c.b16 %v706, %v704
    %v783 = vpack.c.b16 %v709, %v707
    %v784 = vpack.c.b16 %v710, %v708
    %v785 = vpack.c.b16 %v713, %v711
    %v786 = vpack.c.b16 %v714, %v712
    %v787 = vpack.c.b16 %v717, %v715
    %v788 = vpack.c.b16 %v718, %v716
    %v789 = vpack.c.b16 %v721, %v719
    %v790 = vpack.c.b16 %v722, %v720
    %v791 = vpack.c.b16 %v725, %v723
    %v792 = vpack.c.b16 %v726, %v724
    %v793 = vpack.c.b16 %v729, %v727
    %v794 = vpack.c.b16 %v730, %v728
    %859 = vmatprep.subr.bf16.mxu0 %v732
    %860 = vmatpush1.bf16.msra.mxu0 %v731
    %861 = vmatprep.subr.bf16.mxu0 %v734
    %862 = vmatpush1.bf16.msra.mxu0 %v733
    %863 = vmatprep.subr.bf16.mxu0 %v736
    %864 = vmatpush1.bf16.msra.mxu0 %v735
    %865 = vmatprep.subr.bf16.mxu0 %v738
    %866 = vmatpush1.bf16.msra.mxu0 %v737
    %867 = vmatprep.subr.bf16.mxu0 %v740
    %868 = vmatpush1.bf16.msra.mxu0 %v739
    %869 = vmatprep.subr.bf16.mxu0 %v742
    %870 = vmatpush1.bf16.msra.mxu0 %v741
    %871 = vmatprep.subr.bf16.mxu0 %v744
    %872 = vmatpush1.bf16.msra.mxu0 %v743
    %873 = vmatprep.subr.bf16.mxu0 %v746
    %874 = vmatpush1.bf16.msra.mxu0 %v745
    %875 = vmatprep.subr.bf16.mxu0 %v748
    %876 = vmatpush1.bf16.msra.mxu0 %v747
    %877 = vmatprep.subr.bf16.mxu0 %v750
    %878 = vmatpush1.bf16.msra.mxu0 %v749
    %879 = vmatprep.subr.bf16.mxu0 %v752
    %880 = vmatpush1.bf16.msra.mxu0 %v751
    %881 = vmatprep.subr.bf16.mxu0 %v754
    %882 = vmatpush1.bf16.msra.mxu0 %v753
    %883 = vmatprep.subr.bf16.mxu0 %v756
    %884 = vmatpush1.bf16.msra.mxu0 %v755
    %885 = vmatprep.subr.bf16.mxu0 %v758
    %886 = vmatpush1.bf16.msra.mxu0 %v757
    %887 = vmatprep.subr.bf16.mxu0 %v760
    %888 = vmatpush1.bf16.msra.mxu0 %v759
    %889 = vmatprep.subr.bf16.mxu0 %v762
    %890 = vmatpush1.bf16.msra.mxu0 %v761
    %891 = vmatprep.mubr.bf16.mxu0 %v460
    %892 = vmatmul.mubr.bf16.gmra.mrb[0].mxu0 %v459
    %v893 = vpop.f32.mrb[0].mxu0
    %v894 = vadd.f32 %v532, %v893
    %v895 = vpop.f32.mrb[0].mxu0
    %v896 = vadd.f32 %v536, %v895
    %v897 = vpop.f32.mrb[0].mxu0
    %v898 = vadd.f32 %v532, %v897
    %v899 = vpop.f32.mrb[0].mxu0
    %v900 = vadd.f32 %v536, %v899
    %901 = vdwg.mxu0
    %902 = vmatprep.subr.bf16.mxu0 %v764
    %903 = vmatpush1.bf16.msra.mxu0 %v763
    %904 = vmatprep.subr.bf16.mxu0 %v766
    %905 = vmatpush1.bf16.msra.mxu0 %v765
    %906 = vmatprep.subr.bf16.mxu0 %v768
    %907 = vmatpush1.bf16.msra.mxu0 %v767
    %908 = vmatprep.subr.bf16.mxu0 %v770
    %909 = vmatpush1.bf16.msra.mxu0 %v769
    %910 = vmatprep.subr.bf16.mxu0 %v772
    %911 = vmatpush1.bf16.msra.mxu0 %v771
    %912 = vmatprep.subr.bf16.mxu0 %v774
    %913 = vmatpush1.bf16.msra.mxu0 %v773
    %914 = vmatprep.subr.bf16.mxu0 %v776
    %915 = vmatpush1.bf16.msra.mxu0 %v775
    %916 = vmatprep.subr.bf16.mxu0 %v778
    %917 = vmatpush1.bf16.msra.mxu0 %v777
    %918 = vmatprep.subr.bf16.mxu0 %v780
    %919 = vmatpush1.bf16.msra.mxu0 %v779
    %920 = vmatprep.subr.bf16.mxu0 %v782
    %921 = vmatpush1.bf16.msra.mxu0 %v781
    %922 = vmatprep.subr.bf16.mxu0 %v784
    %923 = vmatpush1.bf16.msra.mxu0 %v783
    %924 = vmatprep.subr.bf16.mxu0 %v786
    %925 = vmatpush1.bf16.msra.mxu0 %v785
    %926 = vmatprep.subr.bf16.mxu0 %v788
    %927 = vmatpush1.bf16.msra.mxu0 %v787
    %928 = vmatprep.subr.bf16.mxu0 %v790
    %929 = vmatpush1.bf16.msra.mxu0 %v789
    %930 = vmatprep.subr.bf16.mxu0 %v792
    %931 = vmatpush1.bf16.msra.mxu0 %v791
    %932 = vmatprep.subr.bf16.mxu0 %v794
    %933 = vmatpush1.bf16.msra.mxu0 %v793
    %934 = vmatprep.mubr.bf16.mxu0 %v462
    %935 = vmatmul.mubr.bf16.gmra.mrb[0].mxu0 %v461
    %v936 = vpop.f32.mrb[0].mxu0
    %v937 = vadd.f32 %v894, %v936
    %v938 = vpop.f32.mrb[0].mxu0
    %v939 = vadd.f32 %v896, %v938
    %v940 = vpop.f32.mrb[0].mxu0
    %v941 = vadd.f32 %v898, %v940
    %v942 = vpop.f32.mrb[0].mxu0
    %v943 = vadd.f32 %v900, %v942
    %944 = vdwg.mxu0
    %v945 = vmax.f32 %v937, 0.0
    %v946 = vmax.f32 %v939, 0.0
    %v947 = vmax.f32 %v941, 0.0
    %v948 = vmax.f32 %v943, 0.0
    %v949 = vpack.c.bf16 %v947, %v945
    %v950 = vpack.c.bf16 %v948, %v946
    %v951 = vld [vmem:[#allocation11] sm:$0xf]
    %v952 = vld [vmem:[#allocation11 + $0x4] sm:$0xf]
    %v953 = vld [vmem:[#allocation11 + $0x8] sm:$0xf]
    %v954 = vld [vmem:[#allocation11 + $0xc] sm:$0xf]
    %v955 = vld [vmem:[#allocation11 + $0x10] sm:$0xf]
    %v956 = vld [vmem:[#allocation11 + $0x14] sm:$0xf]
    %v957 = vld [vmem:[#allocation11 + $0x18] sm:$0xf]
    %v958 = vld [vmem:[#allocation11 + $0x1c] sm:$0xf]
    %v959 = vld [vmem:[#allocation11 + $0x20] sm:$0xf]
    %v960 = vld [vmem:[#allocation11 + $0x24] sm:$0xf]
    %v961 = vld [vmem:[#allocation11 + $0x28] sm:$0xf]
    %v962 = vld [vmem:[#allocation11 + $0x2c] sm:$0xf]
    %v963 = vld [vmem:[#allocation11 + $0x30] sm:$0xf]
    %v964 = vld [vmem:[#allocation11 + $0x34] sm:$0xf]
    %v965 = vld [vmem:[#allocation11 + $0x38] sm:$0xf]
    %v966 = vld [vmem:[#allocation11 + $0x3c] sm:$0xf]
    %v967 = vld [vmem:[#allocation11 + $0x40] sm:$0xf]
    %v968 = vld [vmem:[#allocation11 + $0x44] sm:$0xf]
    %v969 = vld [vmem:[#allocation11 + $0x48] sm:$0xf]
    %v970 = vld [vmem:[#allocation11 + $0x4c] sm:$0xf]
    %v971 = vld [vmem:[#allocation11 + $0x50] sm:$0xf]
    %v972 = vld [vmem:[#allocation11 + $0x54] sm:$0xf]
    %v973 = vld [vmem:[#allocation11 + $0x58] sm:$0xf]
    %v974 = vld [vmem:[#allocation11 + $0x5c] sm:$0xf]
    %v975 = vld [vmem:[#allocation11 + $0x60] sm:$0xf]
    %v976 = vld [vmem:[#allocation11 + $0x64] sm:$0xf]
    %v977 = vld [vmem:[#allocation11 + $0x68] sm:$0xf]
    %v978 = vld [vmem:[#allocation11 + $0x6c] sm:$0xf]
    %v979 = vld [vmem:[#allocation11 + $0x70] sm:$0xf]
    %v980 = vld [vmem:[#allocation11 + $0x74] sm:$0xf]
    %v981 = vld [vmem:[#allocation11 + $0x78] sm:$0xf]
    %v982 = vld [vmem:[#allocation11 + $0x7c] sm:$0xf]
    %v983 = vld [vmem:[#allocation13] sm:$0x1]
    %v985 = vlaneseq
    %v986 = vshrl.u32 %v985, 7
    %v987 = vsub.s32 0, %v986
    %v988 = vrot.slane %v983, %v987
    %v1022 = vunpack.c.l.b16 %v951
    %v1023 = vunpack.c.l.b16 %v952
    %v1024 = vunpack.c.l.b16 %v953
    %v1025 = vunpack.c.l.b16 %v954
    %v1026 = vunpack.c.l.b16 %v955
    %v1027 = vunpack.c.l.b16 %v956
    %v1028 = vunpack.c.l.b16 %v957
    %v1029 = vunpack.c.l.b16 %v958
    %v1030 = vunpack.c.l.b16 %v959
    %v1031 = vunpack.c.l.b16 %v960
    %v1032 = vunpack.c.l.b16 %v961
    %v1033 = vunpack.c.l.b16 %v962
    %v1034 = vunpack.c.l.b16 %v963
    %v1035 = vunpack.c.l.b16 %v964
    %v1036 = vunpack.c.l.b16 %v965
    %v1037 = vunpack.c.l.b16 %v966
    %v1038 = vunpack.c.l.b16 %v967
    %v1039 = vunpack.c.l.b16 %v968
    %v1040 = vunpack.c.l.b16 %v969
    %v1041 = vunpack.c.l.b16 %v970
    %v1042 = vunpack.c.l.b16 %v971
    %v1043 = vunpack.c.l.b16 %v972
    %v1044 = vunpack.c.l.b16 %v973
    %v1045 = vunpack.c.l.b16 %v974
    %v1046 = vunpack.c.l.b16 %v975
    %v1047 = vunpack.c.l.b16 %v976
    %v1048 = vunpack.c.l.b16 %v977
    %v1049 = vunpack.c.l.b16 %v978
    %v1050 = vunpack.c.l.b16 %v979
    %v1051 = vunpack.c.l.b16 %v980
    %v1052 = vunpack.c.l.b16 %v981
    %v1053 = vunpack.c.l.b16 %v982
    %v1054 = vpack.c.b16 %v1023, %v1022
    %v1055 = vpack.c.b16 %v1025, %v1024
    %v1056 = vpack.c.b16 %v1027, %v1026
    %v1057 = vpack.c.b16 %v1029, %v1028
    %v1058 = vpack.c.b16 %v1031, %v1030
    %v1059 = vpack.c.b16 %v1033, %v1032
    %v1060 = vpack.c.b16 %v1035, %v1034
    %v1061 = vpack.c.b16 %v1037, %v1036
    %v1062 = vpack.c.b16 %v1039, %v1038
    %v1063 = vpack.c.b16 %v1041, %v1040
    %v1064 = vpack.c.b16 %v1043, %v1042
    %v1065 = vpack.c.b16 %v1045, %v1044
    %v1066 = vpack.c.b16 %v1047, %v1046
    %v1067 = vpack.c.b16 %v1049, %v1048
    %v1068 = vpack.c.b16 %v1051, %v1050
    %v1069 = vpack.c.b16 %v1053, %v1052
    %1086 = vmatprep.subr.bf16.mxu0 0
    %1087 = vmatpush1.bf16.msra.mxu0 %v1054
    %1088 = vmatprep.subr.bf16.mxu0 0
    %1089 = vmatpush1.bf16.msra.mxu0 %v1055
    %1090 = vmatprep.subr.bf16.mxu0 0
    %1091 = vmatpush1.bf16.msra.mxu0 %v1056
    %1092 = vmatprep.subr.bf16.mxu0 0
    %1093 = vmatpush1.bf16.msra.mxu0 %v1057
    %1094 = vmatprep.subr.bf16.mxu0 0
    %1095 = vmatpush1.bf16.msra.mxu0 %v1058
    %1096 = vmatprep.subr.bf16.mxu0 0
    %1097 = vmatpush1.bf16.msra.mxu0 %v1059
    %1098 = vmatprep.subr.bf16.mxu0 0
    %1099 = vmatpush1.bf16.msra.mxu0 %v1060
    %1100 = vmatprep.subr.bf16.mxu0 0
    %1101 = vmatpush1.bf16.msra.mxu0 %v1061
    %1102 = vmatprep.subr.bf16.mxu0 0
    %1103 = vmatpush1.bf16.msra.mxu0 %v1062
    %1104 = vmatprep.subr.bf16.mxu0 0
    %1105 = vmatpush1.bf16.msra.mxu0 %v1063
    %1106 = vmatprep.subr.bf16.mxu0 0
    %1107 = vmatpush1.bf16.msra.mxu0 %v1064
    %1108 = vmatprep.subr.bf16.mxu0 0
    %1109 = vmatpush1.bf16.msra.mxu0 %v1065
    %1110 = vmatprep.subr.bf16.mxu0 0
    %1111 = vmatpush1.bf16.msra.mxu0 %v1066
    %1112 = vmatprep.subr.bf16.mxu0 0
    %1113 = vmatpush1.bf16.msra.mxu0 %v1067
    %1114 = vmatprep.subr.bf16.mxu0 0
    %1115 = vmatpush1.bf16.msra.mxu0 %v1068
    %1116 = vmatprep.subr.bf16.mxu0 0
    %1117 = vmatpush1.bf16.msra.mxu0 %v1069
    %1118 = vmatprep.mubr.bf16.mxu0 %v950
    %1119 = vmatmul.mubr.bf16.gmra.mrb[0].mxu0 %v949
    %v1120 = vpop.f32.mrb[0].mxu0
    %v1121 = vadd.f32 %v988, %v1120
    %v1122 = vpop.f32.mrb[0].mxu0
    %v1123 = vpop.f32.mrb[0].mxu0
    %v1124 = vadd.f32 %v988, %v1123
    %v1125 = vpop.f32.mrb[0].mxu0
    %1126 = vdwg.mxu0
    %v1127 = vmax.f32 %v1121, 0.0
    %v1128 = vmax.f32 %v1124, 0.0
    %v1129 = vpack.c.bf16 %v1128, %v1127
    %v1130 = vld [vmem:[#allocation14] sm:$0xf]
    %v1131 = vld [vmem:[#allocation14 + $0x4] sm:$0xf]
    %v1132 = vld [vmem:[#allocation14 + $0x8] sm:$0xf]
    %v1133 = vld [vmem:[#allocation14 + $0xc] sm:$0xf]
    %v1134 = vld [vmem:[#allocation14 + $0x10] sm:$0xf]
    %v1135 = vld [vmem:[#allocation14 + $0x14] sm:$0xf]
    %v1136 = vld [vmem:[#allocation14 + $0x18] sm:$0xf]
    %v1137 = vld [vmem:[#allocation14 + $0x1c] sm:$0xf]
    %v1138 = vld [vmem:[#allocation14 + $0x20] sm:$0xf]
    %v1139 = vld [vmem:[#allocation14 + $0x24] sm:$0xf]
    %v1140 = vld [vmem:[#allocation14 + $0x28] sm:$0xf]
    %v1141 = vld [vmem:[#allocation14 + $0x2c] sm:$0xf]
    %v1142 = vld [vmem:[#allocation14 + $0x30] sm:$0xf]
    %v1143 = vld [vmem:[#allocation14 + $0x34] sm:$0xf]
    %v1144 = vld [vmem:[#allocation14 + $0x38] sm:$0xf]
    %v1145 = vld [vmem:[#allocation14 + $0x3c] sm:$0xf]
    %v1146 = vld [vmem:[#allocation16] sm:$0x1]
    %v1148 = vlaneseq
    %v1149 = vshrl.u32 %v1148, 7
    %v1150 = vsub.s32 0, %v1149
    %v1151 = vrot.slane %v1146, %v1150
    %v1169 = vunpack.c.l.b16 %v1130
    %v1170 = vunpack.c.l.b16 %v1131
    %v1171 = vunpack.c.l.b16 %v1132
    %v1172 = vunpack.c.l.b16 %v1133
    %v1173 = vunpack.c.l.b16 %v1134
    %v1174 = vunpack.c.l.b16 %v1135
    %v1175 = vunpack.c.l.b16 %v1136
    %v1176 = vunpack.c.l.b16 %v1137
    %v1177 = vunpack.c.l.b16 %v1138
    %v1178 = vunpack.c.l.b16 %v1139
    %v1179 = vunpack.c.l.b16 %v1140
    %v1180 = vunpack.c.l.b16 %v1141
    %v1181 = vunpack.c.l.b16 %v1142
    %v1182 = vunpack.c.l.b16 %v1143
    %v1183 = vunpack.c.l.b16 %v1144
    %v1184 = vunpack.c.l.b16 %v1145
    %v1185 = vpack.c.b16 %v1170, %v1169
    %v1186 = vpack.c.b16 %v1172, %v1171
    %v1187 = vpack.c.b16 %v1174, %v1173
    %v1188 = vpack.c.b16 %v1176, %v1175
    %v1189 = vpack.c.b16 %v1178, %v1177
    %v1190 = vpack.c.b16 %v1180, %v1179
    %v1191 = vpack.c.b16 %v1182, %v1181
    %v1192 = vpack.c.b16 %v1184, %v1183
    %1201 = vmatprep.subr.bf16.mxu0 0
    %1202 = vmatpush1.bf16.msra.mxu0 %v1185
    %1203 = vmatprep.subr.bf16.mxu0 0
    %1204 = vmatpush1.bf16.msra.mxu0 %v1186
    %1205 = vmatprep.subr.bf16.mxu0 0
    %1206 = vmatpush1.bf16.msra.mxu0 %v1187
    %1207 = vmatprep.subr.bf16.mxu0 0
    %1208 = vmatpush1.bf16.msra.mxu0 %v1188
    %1209 = vmatprep.subr.bf16.mxu0 0
    %1210 = vmatpush1.bf16.msra.mxu0 %v1189
    %1211 = vmatprep.subr.bf16.mxu0 0
    %1212 = vmatpush1.bf16.msra.mxu0 %v1190
    %1213 = vmatprep.subr.bf16.mxu0 0
    %1214 = vmatpush1.bf16.msra.mxu0 %v1191
    %1215 = vmatprep.subr.bf16.mxu0 0
    %1216 = vmatpush1.bf16.msra.mxu0 %v1192
    %1217 = vmatprep.subr.bf16.mxu0 0
    %1218 = vmatpush1.bf16.msra.mxu0 0
    %1219 = vmatprep.subr.bf16.mxu0 0
    %1220 = vmatpush1.bf16.msra.mxu0 0
    %1221 = vmatprep.subr.bf16.mxu0 0
    %1222 = vmatpush1.bf16.msra.mxu0 0
    %1223 = vmatprep.subr.bf16.mxu0 0
    %1224 = vmatpush1.bf16.msra.mxu0 0
    %1225 = vmatprep.subr.bf16.mxu0 0
    %1226 = vmatpush1.bf16.msra.mxu0 0
    %1227 = vmatprep.subr.bf16.mxu0 0
    %1228 = vmatpush1.bf16.msra.mxu0 0
    %1229 = vmatprep.subr.bf16.mxu0 0
    %1230 = vmatpush1.bf16.msra.mxu0 0
    %1231 = vmatprep.subr.bf16.mxu0 0
    %1232 = vmatpush1.bf16.msra.mxu0 0
    %1233 = vmatprep.mubr.bf16.mxu0 0
    %1234 = vmatmul.mubr.bf16.gmra.mrb[0].mxu0 %v1129
    %v1235 = vpop.f32.mrb[0].mxu0
    %v1236 = vadd.f32 %v1151, %v1235
    %v1237 = vpop.f32.mrb[0].mxu0
    %v1238 = vpop.f32.mrb[0].mxu0
    %v1239 = vadd.f32 %v1151, %v1238
    %v1240 = vpop.f32.mrb[0].mxu0
    %1241 = vdwg.mxu0
    %v1242 = vpack.c.bf16 %v1239, %v1236
    %v1244 = vcombine.high %v1242, %v1242
    %v1246 = vunpack.c.l.s4 1966171168
    %v1247 = vunpack.c.0.s8 %v1246
    %v1248 = vlaneseq
    %v1249 = vshrl.u32 %v1248, 7
    %v1250 = vsub.s32 %v1247, %v1249
    %v1251 = vrot.slane %v1242, %v1250
    %v1253 = vunpack.c.l.s4 1966171168
    %v1254 = vunpack.c.0.s8 %v1253
    %v1255 = vlaneseq
    %v1256 = vshrl.u32 %v1255, 7
    %v1257 = vsub.s32 %v1254, %v1256
    %v1258 = vrot.slane %v1244, %v1257
    %v1259 = vcombine.high %v1251, %v1251
    %v1260 = vcombine.high %v1258, %v1258
    %v1262 = vunpack.c.l.s4 1966171168
    %v1263 = vunpack.c.0.s8 %v1262
    %v1264 = vlaneseq
    %v1265 = vshrl.u32 %v1264, 7
    %v1266 = vsub.s32 %v1263, %v1265
    %v1267 = vrot.slane %v1251, %v1266
    %v1269 = vunpack.c.l.s4 1966171168
    %v1270 = vunpack.c.0.s8 %v1269
    %v1271 = vlaneseq
    %v1272 = vshrl.u32 %v1271, 7
    %v1273 = vsub.s32 %v1270, %v1272
    %v1274 = vrot.slane %v1258, %v1273
    %v1276 = vunpack.c.l.s4 1966171168
    %v1277 = vunpack.c.0.s8 %v1276
    %v1278 = vlaneseq
    %v1279 = vshrl.u32 %v1278, 7
    %v1280 = vsub.s32 %v1277, %v1279
    %v1281 = vrot.slane %v1259, %v1280
    %v1283 = vunpack.c.l.s4 1966171168
    %v1284 = vunpack.c.0.s8 %v1283
    %v1285 = vlaneseq
    %v1286 = vshrl.u32 %v1285, 7
    %v1287 = vsub.s32 %v1284, %v1286
    %v1288 = vrot.slane %v1260, %v1287
    %v1289 = vcombine.high %v1267, %v1267
    %v1290 = vcombine.high %v1274, %v1274
    %v1291 = vcombine.high %v1281, %v1281
    %v1292 = vcombine.high %v1288, %v1288
    %1301 = vst [vmem:[#allocation17] sm:$0x1] %v1267
    %1302 = vst [vmem:[#allocation17 + $0x1] sm:$0x1] %v1281
    %1303 = vst [vmem:[#allocation17 + $0x2] sm:$0x1] %v1289
    %1304 = vst [vmem:[#allocation17 + $0x3] sm:$0x1] %v1291
    %1305 = vst [vmem:[#allocation17 + $0x4] sm:$0x1] %v1274
    %1306 = vst [vmem:[#allocation17 + $0x5] sm:$0x1] %v1288
    %1307 = vst [vmem:[#allocation17 + $0x6] sm:$0x1] %v1290
    %1308 = vst [vmem:[#allocation17 + $0x7] sm:$0x1] %v1292
    // Predicated region
    $region74: #{mlp_post_crnn_pretrained.1} parent=1 // pred_check
      _
    $region75: #{mlp_post_crnn_pretrained.1} parent=1 // pred_check_branch
      %1310 = sbr.rel (0) target = $region77
    $region76: #{mlp_post_crnn_pretrained.1} parent=1 // pred_region
      %s1312 = ssub.s32 128, 16
      %1313 = vsyncadd [#allocation4], %s1312
      %s1314 = sshll.u32 [#allocation17], 4
      %s1315 = int_to_ptr.vmem [resolvable:$true] %s1314
      %1320 = dma.vmem_to_hbm [thread:$0]  %s1315, 16, %s9, [#allocation4], 16, 16, 1
    $region77: #{mlp_post_crnn_pretrained.1} parent=1 // pred_fallthru
      _
    // Predicated region
    $region78: #{mlp_post_crnn_pretrained.1} parent=1 // pred_check
      _
    $region79: #{mlp_post_crnn_pretrained.1} parent=1 // pred_check_branch
      %1322 = sbr.rel (0) target = $region81
    $region80: #{mlp_post_crnn_pretrained.1} parent=1 // pred_region
      %1323 = dma.done [#allocation4], 128
    $region81: #{mlp_post_crnn_pretrained.1} parent=1 // pred_fallthru
      _
    %1324 = vsyncpa [#allocation3], 1
    %1325 = vsyncpa [#allocation6], 1
    %1326 = vsyncpa [#allocation9], 1
    %1327 = vsyncpa [#allocation12], 1
    %1328 = vsyncpa [#allocation15], 1
    %1329 = vsyncpa [#allocation4], 1

</llo_original>
